<compile_context>
chip_gen: v5e
topology: v5e:2x2
jax: 0.10.0
libtpu: 0.0.40
codegen_flags: <defaults>
</compile_context>

<pallas_src>
import functools

import jax
import jax.numpy as jnp
from jax import lax
from jax.experimental import pallas as pl
from jax.experimental.pallas import tpu as pltpu

LANE = 128          # vreg lane width: padded feature width & batch-tile quantum
SUBLANE = 8
TARGET_TILES = 8    # aim for >= 8 batch tiles (v7x megacore sharding + pipelining)
MAX_TB = 2048       # batch-tile cap (single-TC v5e/v6e like fat tiles; VMEM-safe)


def _round_up(x, m):
    return (x + m - 1) // m * m


def _cdiv(a, b):
    return -(-a // b)


def _pick_tb(batch):
    """Batch-tile rows: multiple of 128 (lane-dense packed output), clamped to
    [LANE, MAX_TB], sized so the grid has ~TARGET_TILES steps."""
    tb = _round_up(_cdiv(batch, TARGET_TILES), LANE)
    return int(min(max(tb, LANE), MAX_TB))


# ---------------------------------------------------------------------------
# Fused Pallas kernel: whole MLP in one body
# ---------------------------------------------------------------------------
def _fused_mlp_kernel(*refs):
    """refs = (x_ref, w1, b1, ..., wN, bN, o_ref).

    Hidden layers: h = relu(h @ W_i + b_i)   (eval-mode BN folded into W_i, b_i)
    Final layer:   o = W_N @ h^T + b_N       -> lane-dense (out_dim, tb) tile
    Matmuls run in bf16 on the MXU with f32 accumulation; elementwise math is f32.
    """
    x_ref, o_ref = refs[0], refs[-1]
    wb = refs[1:-1]
    n_layers = len(wb) // 2

    h = x_ref[...]                                    # (tb, D)
    for i in range(n_layers - 1):
        w = wb[2 * i][...]                            # (d_in, d_out_pad) bf16
        b = wb[2 * i + 1][...]                        # (1, d_out_pad)    f32
        h = jnp.dot(h.astype(w.dtype), w, preferred_element_type=jnp.float32)
        h = jnp.maximum(h + b, 0.0)                   # padded cols stay exactly 0

    w_last = wb[-2][...]                              # (out_dim, d_pad) bf16
    b_last = wb[-1][...]                              # (out_dim, 1)     f32
    # Contract both operands on their last dim (q @ k^T pattern) -> (out_dim, tb).
    y = lax.dot_general(w_last, h.astype(w_last.dtype),
                        dimension_numbers=(((1,), (1,)), ((), ())),
                        preferred_element_type=jnp.float32)
    o_ref[...] = (y + b_last).astype(o_ref.dtype)


# ---------------------------------------------------------------------------
# Parameter construction (deterministic, synthetic) — PyTorch layout semantics
# ---------------------------------------------------------------------------
def init_params(key, input_dim, hidden_dims, output_dim=1):
    params = []
    last_dim = input_dim
    for h in hidden_dims:
        key, kw, kb, kg, kbeta, km, kv = jax.random.split(key, 7)
        params.append(dict(
            w=jax.random.normal(kw, (last_dim, h), jnp.float32) * 0.1,   # (in, out)
            b=jax.random.normal(kb, (1, h), jnp.float32) * 0.1,
            gamma=1.0 + 0.1 * jax.random.normal(kg, (1, h), jnp.float32),
            beta=0.1 * jax.random.normal(kbeta, (1, h), jnp.float32),
            running_mean=0.1 * jax.random.normal(km, (1, h), jnp.float32),
            running_var=jnp.abs(1.0 + 0.1 * jax.random.normal(kv, (1, h), jnp.float32)),
        ))
        last_dim = h
    key, kw, kb = jax.random.split(key, 3)
    params.append(dict(
        w=jax.random.normal(kw, (last_dim, output_dim), jnp.float32) * 0.1,
        b=jax.random.normal(kb, (1, output_dim), jnp.float32) * 0.1,
    ))
    return params


# ---------------------------------------------------------------------------
# One-time prep: fold eval-mode BN into Linear, pad OUTPUT feature dims to 128,
# transpose the final layer to (out, in), cast weights to bf16 (biases stay f32).
# ---------------------------------------------------------------------------
def prepare_params(params, eps=1e-5):
    prepared = []
    in_dim = params[0]["w"].shape[0]          # first-layer input stays UNPADDED
    for layer in params[:-1]:
        # bn(y) = gamma*(y-mean)/sqrt(var+eps) + beta = scale*y + shift
        scale = layer["gamma"] / jnp.sqrt(layer["running_var"] + eps)   # (1, h)
        shift = layer["beta"] - layer["running_mean"] * scale
        w = layer["w"] * scale                                          # (in, h)
        b = layer["b"] * scale + shift                                  # (1, h)
        di, do = w.shape
        dop = _round_up(do, LANE)
        wp = jnp.zeros((in_dim, dop), jnp.float32).at[:di, :do].set(w)
        bp = jnp.zeros((1, dop), jnp.float32).at[:, :do].set(b)         # pad bias = 0
        prepared.append((wp.astype(jnp.bfloat16), bp))
        in_dim = dop
    last = params[-1]
    di, do = last["w"].shape                  # (in, out)
    wp = jnp.zeros((do, in_dim), jnp.float32).at[:, :di].set(last["w"].T)
    bp = last["b"].reshape(do, 1)
    prepared.append((wp.astype(jnp.bfloat16), bp))
    # TODO(synk): optional fp8 weight quantization for v7x (MXU-native) omitted.
    return prepared


# ---------------------------------------------------------------------------
# Forward pass (eval-mode semantics of the PyTorch module)
# ---------------------------------------------------------------------------
@jax.jit
def simple_mlp_forward(x, prepared):
    B, D = x.shape
    out_dim = prepared[-1][0].shape[0]

    tb = _pick_tb(B)
    grid = _cdiv(B, tb)                 # ragged last tile is fine (row-independent)
    total = grid * tb

    flat_args = [x]
    in_specs = [pl.BlockSpec((tb, D), lambda i: (i, 0),
                             memory_space=pltpu.MemorySpace.VMEM)]
    for w, b in prepared:
        flat_args.extend([w, b])
        in_specs.append(pl.BlockSpec(w.shape, lambda i: (0, 0),
                                     memory_space=pltpu.MemorySpace.VMEM,
                                     pipeline_mode=pl.Buffered(1)))
        in_specs.append(pl.BlockSpec(b.shape, lambda i: (0, 0),
                                     memory_space=pltpu.MemorySpace.VMEM,
                                     pipeline_mode=pl.Buffered(1)))

    out = pl.pallas_call(
        _fused_mlp_kernel,
        out_shape=jax.ShapeDtypeStruct((out_dim, total), jnp.float32),
        grid=(grid,),
        in_specs=in_specs,
        out_specs=pl.BlockSpec((out_dim, tb), lambda i: (0, i),
                               memory_space=pltpu.MemorySpace.VMEM),
        compiler_params=pltpu.CompilerParams(
            dimension_semantics=("parallel",)),
    )(*flat_args)

    # TODO(synk): Dropout is identity in eval mode; train-mode dropout
    # (pltpu.prng_random_bits masking) is intentionally omitted.
    return out[:, :B].T                 # (B, out_dim); drops padded batch rows


# ---------------------------------------------------------------------------
# Pure-JAX f32 reference (unfolded, unpadded) for the sanity check
# ---------------------------------------------------------------------------
def reference_forward(x, params, eps=1e-5):
    h = x
    for layer in params[:-1]:
        y = h @ layer["w"] + layer["b"]
        y = layer["gamma"] * (y - layer["running_mean"]) / jnp.sqrt(
            layer["running_var"] + eps) + layer["beta"]
        h = jnp.maximum(y, 0.0)
    last = params[-1]
    return h @ last["w"] + last["b"]


if __name__ == "__main__":
    key = jax.random.PRNGKey(0)
    batch, input_dim, hidden_dims, output_dim = 200, 32, (64, 32), 1

    kx, kp = jax.random.split(key)
    x = jax.random.normal(kx, (batch, input_dim), jnp.float32)
    params = init_params(kp, input_dim, hidden_dims, output_dim)
    prepared = prepare_params(params)

    out = simple_mlp_forward(x, prepared)
    out = jax.block_until_ready(out)

    ref = reference_forward(x, params)
    assert out.shape == (batch, output_dim), out.shape
    max_err = float(jnp.max(jnp.abs(out - ref)))
    # bf16 MXU inputs (f32 accumulation) => loosened tolerance vs. the f32 reference.
    assert jnp.allclose(out, ref, atol=3e-2, rtol=3e-2), max_err

    print("KERNEL_OK")
</pallas_src>

<mosaic_0001>
module attributes {stable_mosaic.version = 11 : i64} {
  func.func @_fused_mlp_kernel(%arg0: i32, %arg1: memref<128x32xf32, #tpu.memory_space<vmem>>, %arg2: memref<32x128xbf16, #tpu.memory_space<vmem>>, %arg3: memref<1x128xf32, #tpu.memory_space<vmem>>, %arg4: memref<128x128xbf16, #tpu.memory_space<vmem>>, %arg5: memref<1x128xf32, #tpu.memory_space<vmem>>, %arg6: memref<1x128xbf16, #tpu.memory_space<vmem>>, %arg7: memref<1x1xf32, #tpu.memory_space<vmem>>, %arg8: memref<1x128xf32, #tpu.memory_space<vmem>>) attributes {dimension_semantics = [#tpu.dimension_semantics<parallel>], iteration_bounds = array<i64: 2>, scalar_prefetch = 0 : i64, scratch_operands = 0 : i64, tpu.core_type = #tpu.core_type<tc>, window_params = [{transform_indices = @transform_0, window_bounds = array<i64: 128, 32>}, {pipeline_mode = #tpu.pipeline_mode<synchronous>, transform_indices = @transform_1, window_bounds = array<i64: 32, 128>}, {pipeline_mode = #tpu.pipeline_mode<synchronous>, transform_indices = @transform_2, window_bounds = array<i64: 1, 128>}, {pipeline_mode = #tpu.pipeline_mode<synchronous>, transform_indices = @transform_3, window_bounds = array<i64: 128, 128>}, {pipeline_mode = #tpu.pipeline_mode<synchronous>, transform_indices = @transform_4, window_bounds = array<i64: 1, 128>}, {pipeline_mode = #tpu.pipeline_mode<synchronous>, transform_indices = @transform_5, window_bounds = array<i64: 1, 128>}, {pipeline_mode = #tpu.pipeline_mode<synchronous>, transform_indices = @transform_6, window_bounds = array<i64: 1, 1>}, {transform_indices = @transform_7, window_bounds = array<i64: 1, 128>}]} {
    %c0 = arith.constant 0 : index
    %c0_0 = arith.constant 0 : index
    %0 = vector.load %arg1[%c0, %c0_0] : memref<128x32xf32, #tpu.memory_space<vmem>>, vector<128x32xf32>
    %c0_1 = arith.constant 0 : index
    %c0_2 = arith.constant 0 : index
    %1 = vector.load %arg2[%c0_1, %c0_2] : memref<32x128xbf16, #tpu.memory_space<vmem>>, vector<32x128xbf16>
    %c0_3 = arith.constant 0 : index
    %c0_4 = arith.constant 0 : index
    %2 = vector.load %arg3[%c0_3, %c0_4] : memref<1x128xf32, #tpu.memory_space<vmem>>, vector<1x128xf32>
    %3 = arith.truncf %0 : vector<128x32xf32> to vector<128x32xbf16>
    %cst = arith.constant dense<0.000000e+00> : vector<128x128xf32>
    %4 = tpu.matmul %3, %1, %cst {dimension_numbers = #tpu.dot_dimension_numbers<[1], [0], [0], [1], [0, 0, 1, 1], [], []>} : vector<128x32xbf16>, vector<32x128xbf16>, vector<128x128xf32> -> vector<128x128xf32>
    %5 = vector.broadcast %2 : vector<1x128xf32> to vector<128x128xf32>
    %6 = arith.addf %4, %5 : vector<128x128xf32>
    %cst_5 = arith.constant 0.000000e+00 : f32
    %7 = vector.broadcast %cst_5 : f32 to vector<128x128xf32>
    %8 = arith.maximumf %6, %7 : vector<128x128xf32>
    %c0_6 = arith.constant 0 : index
    %c0_7 = arith.constant 0 : index
    %9 = vector.load %arg4[%c0_6, %c0_7] : memref<128x128xbf16, #tpu.memory_space<vmem>>, vector<128x128xbf16>
    %c0_8 = arith.constant 0 : index
    %c0_9 = arith.constant 0 : index
    %10 = vector.load %arg5[%c0_8, %c0_9] : memref<1x128xf32, #tpu.memory_space<vmem>>, vector<1x128xf32>
    %11 = arith.truncf %8 : vector<128x128xf32> to vector<128x128xbf16>
    %cst_10 = arith.constant dense<0.000000e+00> : vector<128x128xf32>
    %12 = tpu.matmul %11, %9, %cst_10 {dimension_numbers = #tpu.dot_dimension_numbers<[1], [0], [0], [1], [0, 0, 1, 1], [], []>} : vector<128x128xbf16>, vector<128x128xbf16>, vector<128x128xf32> -> vector<128x128xf32>
    %13 = vector.broadcast %10 : vector<1x128xf32> to vector<128x128xf32>
    %14 = arith.addf %12, %13 : vector<128x128xf32>
    %cst_11 = arith.constant 0.000000e+00 : f32
    %15 = vector.broadcast %cst_11 : f32 to vector<128x128xf32>
    %16 = arith.maximumf %14, %15 : vector<128x128xf32>
    %c0_12 = arith.constant 0 : index
    %c0_13 = arith.constant 0 : index
    %17 = vector.load %arg6[%c0_12, %c0_13] : memref<1x128xbf16, #tpu.memory_space<vmem>>, vector<1x128xbf16>
    %c0_14 = arith.constant 0 : index
    %c0_15 = arith.constant 0 : index
    %18 = vector.load %arg7[%c0_14, %c0_15] : memref<1x1xf32, #tpu.memory_space<vmem>>, vector<1x1xf32>
    %19 = arith.truncf %16 : vector<128x128xf32> to vector<128x128xbf16>
    %cst_16 = arith.constant dense<0.000000e+00> : vector<1x128xf32>
    %20 = tpu.matmul %17, %19, %cst_16 {dimension_numbers = #tpu.dot_dimension_numbers<[1], [1], [0], [0], [0, 0, 1, 0], [], []>} : vector<1x128xbf16>, vector<128x128xbf16>, vector<1x128xf32> -> vector<1x128xf32>
    %21 = vector.broadcast %18 : vector<1x1xf32> to vector<1x128xf32>
    %22 = arith.addf %20, %21 : vector<1x128xf32>
    %c0_17 = arith.constant 0 : index
    %c0_18 = arith.constant 0 : index
    %23 = vector.load %arg8[%c0_17, %c0_18] : memref<1x128xf32, #tpu.memory_space<vmem>>, vector<1x128xf32>
    tpu.vector_store %arg8[%c0_17, %c0_18], %22 {strides = array<i32>} : memref<1x128xf32, #tpu.memory_space<vmem>>, vector<1x128xf32>,
    return
  }
  func.func @transform_0(%arg0: i32) -> (i32, i32) {
    %c0_i32 = arith.constant 0 : i32
    %c0_i32_0 = arith.constant 0 : i32
    return %arg0, %c0_i32 : i32, i32
  }
  func.func @transform_1(%arg0: i32) -> (i32, i32) {
    %c0_i32 = arith.constant 0 : i32
    %c0_i32_0 = arith.constant 0 : i32
    %c0_i32_1 = arith.constant 0 : i32
    return %c0_i32, %c0_i32_0 : i32, i32
  }
  func.func @transform_2(%arg0: i32) -> (i32, i32) {
    %c0_i32 = arith.constant 0 : i32
    %c0_i32_0 = arith.constant 0 : i32
    %c0_i32_1 = arith.constant 0 : i32
    return %c0_i32, %c0_i32_0 : i32, i32
  }
  func.func @transform_3(%arg0: i32) -> (i32, i32) {
    %c0_i32 = arith.constant 0 : i32
    %c0_i32_0 = arith.constant 0 : i32
    %c0_i32_1 = arith.constant 0 : i32
    return %c0_i32, %c0_i32_0 : i32, i32
  }
  func.func @transform_4(%arg0: i32) -> (i32, i32) {
    %c0_i32 = arith.constant 0 : i32
    %c0_i32_0 = arith.constant 0 : i32
    %c0_i32_1 = arith.constant 0 : i32
    return %c0_i32, %c0_i32_0 : i32, i32
  }
  func.func @transform_5(%arg0: i32) -> (i32, i32) {
    %c0_i32 = arith.constant 0 : i32
    %c0_i32_0 = arith.constant 0 : i32
    %c0_i32_1 = arith.constant 0 : i32
    return %c0_i32, %c0_i32_0 : i32, i32
  }
  func.func @transform_6(%arg0: i32) -> (i32, i32) {
    %c0_i32 = arith.constant 0 : i32
    %c0_i32_0 = arith.constant 0 : i32
    %c0_i32_1 = arith.constant 0 : i32
    return %c0_i32, %c0_i32_0 : i32, i32
  }
  func.func @transform_7(%arg0: i32) -> (i32, i32) {
    %c0_i32 = arith.constant 0 : i32
    %c0_i32_0 = arith.constant 0 : i32
    return %c0_i32, %arg0 : i32, i32
  }
}

</mosaic_0001>

<llo_original>
// kernel: simple_mlp_forward.1
$region0: #{simple_mlp_forward.1}
  #allocation0 [shape = 'u32[]', space=smem, size = 0x4, offset = 0x4, fixed_abs, tag = 'smem constant byte address 0x4 - core index']
  #allocation1 [shape = 'u32[72,128]{1,0:T(1,128)}', space=vmem, size = 0x9000, scoped, tag = 'internal scratch']
  #allocation2 [shape = 'f32[1,1]{1,0:T(1,128)S(1)}', space=vmem, size = 0x200, scoped, tag = 'scoped memory for simple_mlp_forward.1']
  %s0 = inlined_call_operand.vmem [shape: f32[200,32], index: 0, kind: input, shape index: {}]
  %s1 = inlined_call_operand.vmem [shape: bf16[32,128], index: 1, kind: input, shape index: {}]
  %s2 = inlined_call_operand.vmem [shape: f32[1,128], index: 2, kind: input, shape index: {}]
  %s3 = inlined_call_operand.vmem [shape: bf16[128,128], index: 3, kind: input, shape index: {}]
  %s4 = inlined_call_operand.vmem [shape: f32[1,128], index: 4, kind: input, shape index: {}]
  %s5 = inlined_call_operand.vmem [shape: bf16[1,128], index: 5, kind: input, shape index: {}]
  %s6 = inlined_call_operand.<no memory space> [shape: f32[1,1], index: 6, kind: input, shape index: {}]
  %s7 = inlined_call_operand.vmem [shape: f32[1,256], index: 7, kind: output, shape index: {}]
  %s8 = sld [smem:[#allocation0]]
  $region61: #{simple_mlp_forward.1} parent=0
    _
  %s10 = ssub.s32 1, %s8
  %s11 = scalar_select 0, %s10, %s8
  %v12 = vstv %s6
  %13 = vst [vmem:[#allocation2] sm:$0x1] %v12
  loop: start=0, step=1, limit=4
  $region2: #{simple_mlp_forward.1} parent=0 // loop_pre_header
    _
  $region3: #{simple_mlp_forward.1} parent=0 // loop_header
    %s15 = sphi 0, %s19
    %p16 = scmp.ge.s32.totalorder %s15, 4
    %s25 = sphi 0, %s27
    %s28 = sphi 0, %s25
    %s29 = sphi 0, %s28
    %s45 = sphi 0, %s29
    %s49 = sphi 0, %s49
    %s51 = sphi 0, %s49
    %s52 = sphi 0, %s51
    %s66 = sphi 0, %s52
    %s70 = sphi 0, %s70
    %s72 = sphi 0, %s70
    %s73 = sphi 0, %s72
    %s87 = sphi 0, %s73
    %s91 = sphi 0, %s91
    %s93 = sphi 0, %s91
    %s94 = sphi 0, %s93
    %s108 = sphi 0, %s94
    %s112 = sphi 0, %s112
    %s114 = sphi 0, %s112
    %s115 = sphi 0, %s114
    %s129 = sphi 0, %s115
    %s133 = sphi 0, %s133
    %s135 = sphi 0, %s133
    %s136 = sphi 0, %s135
    %s150 = sphi 0, %s136
    %s154 = sphi 0, %s154
    %s156 = sphi 0, %s154
    %s157 = sphi 0, %s156
    %s171 = sphi 0, %s157
    %s177 = sphi 0, %s179
    %s180 = sphi 0, %s177
    %s181 = sphi 0, %s180
    %s197 = sphi 0, %s181
  $region4: #{simple_mlp_forward.1} parent=0 // loop_header_branch
    %18 = sbr.rel (%p16) target = $region8
  $region5: #{simple_mlp_forward.1} parent=0 // loop_body
    %s20 = ssub.s32 %s15, 1
    %s21 = ssub.s32 %s15, 2
    %s22 = sadd.s32 %s15, 1
    %s23 = ssub.s32 %s15, %s22
    %p24 = scmp.eq.s32.totalorder %s23, 0
    %s26 = sadd.s32 %s25, 1
    %s27 = scalar_select %p24, %s25, %s26
    %p30 = pneg %p24
    %p31 = scmp.eq.s32.totalorder %s15, 1
    %p32 = por %p30, %p31
    %p33 = scmp.ne.s32.totalorder %s25, %s28
    %p34 = scmp.eq.s32.totalorder %s15, 0
    %p35 = por %p33, %p34
    %p36 = scmp.ne.s32.totalorder %s25, %s28
    %p37 = scmp.eq.s32.totalorder %s20, 1
    %p38 = por %p36, %p37
    %p39 = scmp.ne.s32.totalorder %s28, %s29
    %p40 = scmp.eq.s32.totalorder %s20, 0
    %p41 = por %p39, %p40
    %p42 = scmp.ne.s32.totalorder %s28, %s29
    %p43 = scmp.eq.s32.totalorder %s21, 1
    %p44 = por %p42, %p43
    %p46 = scmp.ne.s32.totalorder %s29, %s45
    %p47 = scmp.eq.s32.totalorder %s21, 0
    %p48 = por %p46, %p47
    %s50 = sadd.s32 %s49, 1
    %p53 = scmp.eq.s32.totalorder %s15, 1
    %p54 = scmp.ne.s32.totalorder %s49, %s51
    %p55 = scmp.eq.s32.totalorder %s15, 0
    %p56 = por %p54, %p55
    %p57 = scmp.ne.s32.totalorder %s49, %s51
    %p58 = scmp.eq.s32.totalorder %s20, 1
    %p59 = por %p57, %p58
    %p60 = scmp.ne.s32.totalorder %s51, %s52
    %p61 = scmp.eq.s32.totalorder %s20, 0
    %p62 = por %p60, %p61
    %p63 = scmp.ne.s32.totalorder %s51, %s52
    %p64 = scmp.eq.s32.totalorder %s21, 1
    %p65 = por %p63, %p64
    %p67 = scmp.ne.s32.totalorder %s52, %s66
    %p68 = scmp.eq.s32.totalorder %s21, 0
    %p69 = por %p67, %p68
    %s71 = sadd.s32 %s70, 1
    %p74 = scmp.eq.s32.totalorder %s15, 1
    %p75 = scmp.ne.s32.totalorder %s70, %s72
    %p76 = scmp.eq.s32.totalorder %s15, 0
    %p77 = por %p75, %p76
    %p78 = scmp.ne.s32.totalorder %s70, %s72
    %p79 = scmp.eq.s32.totalorder %s20, 1
    %p80 = por %p78, %p79
    %p81 = scmp.ne.s32.totalorder %s72, %s73
    %p82 = scmp.eq.s32.totalorder %s20, 0
    %p83 = por %p81, %p82
    %p84 = scmp.ne.s32.totalorder %s72, %s73
    %p85 = scmp.eq.s32.totalorder %s21, 1
    %p86 = por %p84, %p85
    %p88 = scmp.ne.s32.totalorder %s73, %s87
    %p89 = scmp.eq.s32.totalorder %s21, 0
    %p90 = por %p88, %p89
    %s92 = sadd.s32 %s91, 1
    %p95 = scmp.eq.s32.totalorder %s15, 1
    %p96 = scmp.ne.s32.totalorder %s91, %s93
    %p97 = scmp.eq.s32.totalorder %s15, 0
    %p98 = por %p96, %p97
    %p99 = scmp.ne.s32.totalorder %s91, %s93
    %p100 = scmp.eq.s32.totalorder %s20, 1
    %p101 = por %p99, %p100
    %p102 = scmp.ne.s32.totalorder %s93, %s94
    %p103 = scmp.eq.s32.totalorder %s20, 0
    %p104 = por %p102, %p103
    %p105 = scmp.ne.s32.totalorder %s93, %s94
    %p106 = scmp.eq.s32.totalorder %s21, 1
    %p107 = por %p105, %p106
    %p109 = scmp.ne.s32.totalorder %s94, %s108
    %p110 = scmp.eq.s32.totalorder %s21, 0
    %p111 = por %p109, %p110
    %s113 = sadd.s32 %s112, 1
    %p116 = scmp.eq.s32.totalorder %s15, 1
    %p117 = scmp.ne.s32.totalorder %s112, %s114
    %p118 = scmp.eq.s32.totalorder %s15, 0
    %p119 = por %p117, %p118
    %p120 = scmp.ne.s32.totalorder %s112, %s114
    %p121 = scmp.eq.s32.totalorder %s20, 1
    %p122 = por %p120, %p121
    %p123 = scmp.ne.s32.totalorder %s114, %s115
    %p124 = scmp.eq.s32.totalorder %s20, 0
    %p125 = por %p123, %p124
    %p126 = scmp.ne.s32.totalorder %s114, %s115
    %p127 = scmp.eq.s32.totalorder %s21, 1
    %p128 = por %p126, %p127
    %p130 = scmp.ne.s32.totalorder %s115, %s129
    %p131 = scmp.eq.s32.totalorder %s21, 0
    %p132 = por %p130, %p131
    %s134 = sadd.s32 %s133, 1
    %p137 = scmp.eq.s32.totalorder %s15, 1
    %p138 = scmp.ne.s32.totalorder %s133, %s135
    %p139 = scmp.eq.s32.totalorder %s15, 0
    %p140 = por %p138, %p139
    %p141 = scmp.ne.s32.totalorder %s133, %s135
    %p142 = scmp.eq.s32.totalorder %s20, 1
    %p143 = por %p141, %p142
    %p144 = scmp.ne.s32.totalorder %s135, %s136
    %p145 = scmp.eq.s32.totalorder %s20, 0
    %p146 = por %p144, %p145
    %p147 = scmp.ne.s32.totalorder %s135, %s136
    %p148 = scmp.eq.s32.totalorder %s21, 1
    %p149 = por %p147, %p148
    %p151 = scmp.ne.s32.totalorder %s136, %s150
    %p152 = scmp.eq.s32.totalorder %s21, 0
    %p153 = por %p151, %p152
    %s155 = sadd.s32 %s154, 1
    %p158 = scmp.eq.s32.totalorder %s15, 1
    %p159 = scmp.ne.s32.totalorder %s154, %s156
    %p160 = scmp.eq.s32.totalorder %s15, 0
    %p161 = por %p159, %p160
    %p162 = scmp.ne.s32.totalorder %s154, %s156
    %p163 = scmp.eq.s32.totalorder %s20, 1
    %p164 = por %p162, %p163
    %p165 = scmp.ne.s32.totalorder %s156, %s157
    %p166 = scmp.eq.s32.totalorder %s20, 0
    %p167 = por %p165, %p166
    %p168 = scmp.ne.s32.totalorder %s156, %s157
    %p169 = scmp.eq.s32.totalorder %s21, 1
    %p170 = por %p168, %p169
    %p172 = scmp.ne.s32.totalorder %s157, %s171
    %p173 = scmp.eq.s32.totalorder %s21, 0
    %p174 = por %p172, %p173
    %s175 = ssub.s32 %s15, %s22
    %p176 = scmp.eq.s32.totalorder %s175, 0
    %s178 = sadd.s32 %s177, 1
    %s179 = scalar_select %p176, %s177, %s178
    %p182 = pneg %p176
    %p183 = scmp.eq.s32.totalorder %s15, 1
    %p184 = por %p182, %p183
    %p185 = scmp.ne.s32.totalorder %s177, %s180
    %p186 = scmp.eq.s32.totalorder %s15, 0
    %p187 = por %p185, %p186
    %p188 = scmp.ne.s32.totalorder %s177, %s180
    %p189 = scmp.eq.s32.totalorder %s20, 1
    %p190 = por %p188, %p189
    %p191 = scmp.ne.s32.totalorder %s180, %s181
    %p192 = scmp.eq.s32.totalorder %s20, 0
    %p193 = por %p191, %p192
    %p194 = scmp.ne.s32.totalorder %s180, %s181
    %p195 = scmp.eq.s32.totalorder %s21, 1
    %p196 = por %p194, %p195
    %p198 = scmp.ne.s32.totalorder %s181, %s197
    %p199 = scmp.eq.s32.totalorder %s21, 0
    %p200 = por %p198, %p199
    %p201 = scmp.le.s32.totalorder 1, %s15
    %p202 = scmp.lt.s32.totalorder %s15, 3
    %p203 = pnand %p201, %p202
    %p204 = pneg %p203
    // Predicated region
    $region9: #{simple_mlp_forward.1} parent=5 // pred_check
      _
    $region10: #{simple_mlp_forward.1} parent=5 // pred_check_branch
      %206 = sbr.rel (%p203) target = $region12
    $region11: #{simple_mlp_forward.1} parent=5 // pred_region
      %s207 = ssub.s32 %s15, 1
      // Predicated region
      $region13: #{simple_mlp_forward.1} parent=11 // pred_check
        %p208 = pneg %p62
      $region14: #{simple_mlp_forward.1} parent=11 // pred_check_branch
        %210 = sbr.rel (%p208) target = $region16
      $region15: #{simple_mlp_forward.1} parent=11 // pred_region
        _
      $region16: #{simple_mlp_forward.1} parent=11 // pred_fallthru
        _
      // Predicated region
      $region17: #{simple_mlp_forward.1} parent=11 // pred_check
        %p211 = pneg %p83
      $region18: #{simple_mlp_forward.1} parent=11 // pred_check_branch
        %213 = sbr.rel (%p211) target = $region20
      $region19: #{simple_mlp_forward.1} parent=11 // pred_region
        _
      $region20: #{simple_mlp_forward.1} parent=11 // pred_fallthru
        _
      // Predicated region
      $region21: #{simple_mlp_forward.1} parent=11 // pred_check
        %p214 = pneg %p104
      $region22: #{simple_mlp_forward.1} parent=11 // pred_check_branch
        %216 = sbr.rel (%p214) target = $region24
      $region23: #{simple_mlp_forward.1} parent=11 // pred_region
        _
      $region24: #{simple_mlp_forward.1} parent=11 // pred_fallthru
        _
      // Predicated region
      $region25: #{simple_mlp_forward.1} parent=11 // pred_check
        %p217 = pneg %p125
      $region26: #{simple_mlp_forward.1} parent=11 // pred_check_branch
        %219 = sbr.rel (%p217) target = $region28
      $region27: #{simple_mlp_forward.1} parent=11 // pred_region
        _
      $region28: #{simple_mlp_forward.1} parent=11 // pred_fallthru
        _
      // Predicated region
      $region29: #{simple_mlp_forward.1} parent=11 // pred_check
        %p220 = pneg %p146
      $region30: #{simple_mlp_forward.1} parent=11 // pred_check_branch
        %222 = sbr.rel (%p220) target = $region32
      $region31: #{simple_mlp_forward.1} parent=11 // pred_region
        _
      $region32: #{simple_mlp_forward.1} parent=11 // pred_fallthru
        _
      // Predicated region
      $region33: #{simple_mlp_forward.1} parent=11 // pred_check
        %p223 = pneg %p167
      $region34: #{simple_mlp_forward.1} parent=11 // pred_check_branch
        %225 = sbr.rel (%p223) target = $region36
      $region35: #{simple_mlp_forward.1} parent=11 // pred_region
        _
      $region36: #{simple_mlp_forward.1} parent=11 // pred_fallthru
        _
    $region12: #{simple_mlp_forward.1} parent=5 // pred_fallthru
      _
    %p226 = scmp.lt.s32.totalorder %s15, 2
    // Predicated region
    $region37: #{simple_mlp_forward.1} parent=5 // pred_check
      %p227 = pneg %p226
    $region38: #{simple_mlp_forward.1} parent=5 // pred_check_branch
      %229 = sbr.rel (%p227) target = $region40
    $region39: #{simple_mlp_forward.1} parent=5 // pred_region
      // Predicated region
      $region41: #{simple_mlp_forward.1} parent=39 // pred_check
        %p230 = pneg %p35
      $region42: #{simple_mlp_forward.1} parent=39 // pred_check_branch
        %232 = sbr.rel (%p230) target = $region44
      $region43: #{simple_mlp_forward.1} parent=39 // pred_region
        %s233 = smul.u32 16, %s15
        %s234 = ssub.s32 25, %s233
        %p235 = scmp.lt.s32.totalorder %s234, 16
        %s236 = scalar_select %p235, %s234, 16
        %s237 = smul.u32 8, %s236
        %p238 = scmp.lt.s32.totalorder %s233, 24
        %s239 = scalar_select %p238, %s233, 24
        %s240 = smul.addr %s239, 8
        %s241 = scalar_lea.vmem %s0, %s240
        %s242 = smul.u32 16, %s15
        %s243 = ssub.s32 25, %s242
        %p244 = scmp.lt.s32.totalorder %s243, 16
        %s245 = scalar_select %p244, %s243, 16
        %s246 = smul.u32 8, %s245
      $region44: #{simple_mlp_forward.1} parent=39 // pred_fallthru
        _
    $region40: #{simple_mlp_forward.1} parent=5 // pred_fallthru
      _
    %p247 = scmp.le.s32.totalorder 1, %s15
    %p248 = scmp.lt.s32.totalorder %s15, 3
    %p249 = pnand %p247, %p248
    %p250 = pneg %p249
    // Predicated region
    $region45: #{simple_mlp_forward.1} parent=5 // pred_check
      _
    $region46: #{simple_mlp_forward.1} parent=5 // pred_check_branch
      %252 = sbr.rel (%p249) target = $region48
    $region47: #{simple_mlp_forward.1} parent=5 // pred_region
      %s253 = ssub.s32 %s15, 1
      %s254 = smul.u32 16, %s20
      %s255 = ssub.s32 25, %s254
      %p256 = scmp.lt.s32.totalorder %s255, 16
      %s257 = scalar_select %p256, %s255, 16
      %s258 = smul.u32 8, %s257
      %p259 = scmp.lt.s32.totalorder %s254, 24
      %s260 = scalar_select %p259, %s254, 24
      %s261 = smul.addr %s260, 8
      %s262 = scalar_lea.vmem %s0, %s261
      %p263 = pneg %p41
      %p264 = pneg %p38
      %p265 = pneg %p62
      %p266 = pneg %p59
      %p267 = pneg %p83
      %p268 = pneg %p80
      %p269 = pneg %p104
      %p270 = pneg %p101
      %p271 = pneg %p125
      %p272 = pneg %p122
      %p273 = pneg %p146
      %p274 = pneg %p143
      %p275 = pneg %p167
      %p276 = pneg %p164
      %p277 = pneg %p193
      %p278 = pneg %p190
      %p279 = scmp.lt.s32.totalorder %s20, 1
      %s280 = scalar_select %p279, %s20, 1
      %s281 = scalar_lea.vmem %s7, %s280
      %s282 = smul.u32 16, %s20
      %s283 = ssub.s32 25, %s282
      %p284 = scmp.lt.s32.totalorder %s283, 16
      %s285 = scalar_select %p284, %s283, 16
      %s286 = smul.u32 8, %s285
      %p287 = scmp.lt.s32.totalorder %s282, 24
      %s288 = scalar_select %p287, %s282, 24
      %s289 = smul.addr %s288, 8
      %s290 = scalar_lea.vmem %s0, %s289
      %s291 = smul.u32 16, %s20
      %s292 = ssub.s32 25, %s291
      %p293 = scmp.lt.s32.totalorder %s292, 16
      %s294 = scalar_select %p293, %s292, 16
      %s295 = smul.u32 8, %s294
      %p296 = scmp.lt.s32.totalorder %s20, 1
      %s297 = scalar_select %p296, %s20, 1
      %s298 = scalar_lea.vmem %s7, %s297
      %v300 = vld [vmem:[%s290] sm:$0xff]
      %v301 = vld [vmem:[%s290 + $0x8] sm:$0xff]
      %v302 = vld [vmem:[%s290 + $0x10] sm:$0xff]
      %v303 = vld [vmem:[%s290 + $0x18] sm:$0xff]
      %v304 = vld [vmem:[%s290 + $0x20] sm:$0xff]
      %v305 = vld [vmem:[%s290 + $0x28] sm:$0xff]
      %v306 = vld [vmem:[%s290 + $0x30] sm:$0xff]
      %v307 = vld [vmem:[%s290 + $0x38] sm:$0xff]
      %v308 = vld [vmem:[%s290 + $0x40] sm:$0xff]
      %v309 = vld [vmem:[%s290 + $0x48] sm:$0xff]
      %v310 = vld [vmem:[%s290 + $0x50] sm:$0xff]
      %v311 = vld [vmem:[%s290 + $0x58] sm:$0xff]
      %v312 = vld [vmem:[%s290 + $0x60] sm:$0xff]
      %v313 = vld [vmem:[%s290 + $0x68] sm:$0xff]
      %v314 = vld [vmem:[%s290 + $0x70] sm:$0xff]
      %v315 = vld [vmem:[%s290 + $0x78] sm:$0xff]
      %v316 = vld [vmem:[%s1] sm:$0xf]
      %v317 = vld [vmem:[%s1 + $0x4] sm:$0xf]
      %v318 = vld [vmem:[%s1 + $0x8] sm:$0xf]
      %v319 = vld [vmem:[%s1 + $0xc] sm:$0xf]
      %v320 = vld [vmem:[%s2] sm:$0x1]
      %v321 = vpack.c.bf16 %v301, %v300
      %v322 = vpack.c.bf16 %v303, %v302
      %v323 = vpack.c.bf16 %v305, %v304
      %v324 = vpack.c.bf16 %v307, %v306
      %v325 = vpack.c.bf16 %v309, %v308
      %v326 = vpack.c.bf16 %v311, %v310
      %v327 = vpack.c.bf16 %v313, %v312
      %v328 = vpack.c.bf16 %v315, %v314
      %v330 = vperm.slane %v320, 0
      %v336 = vunpack.c.l.b16 %v316
      %v337 = vunpack.c.l.b16 %v317
      %v338 = vunpack.c.l.b16 %v318
      %v339 = vunpack.c.l.b16 %v319
      %v340 = vpack.c.b16 %v337, %v336
      %v341 = vpack.c.b16 %v339, %v338
      %vm344 = vcmask 261120
      %v346 = vsel %vm344, %v321, 0
      %v349 = vsel %vm344, %v322, 0
      %v352 = vsel %vm344, %v323, 0
      %v355 = vsel %vm344, %v324, 0
      %v358 = vsel %vm344, %v325, 0
      %v361 = vsel %vm344, %v326, 0
      %v364 = vsel %vm344, %v327, 0
      %v367 = vsel %vm344, %v328, 0
      %369 = vmatpush.bf16.msra.mxu0 0
      %370 = vmatpush.bf16.msra.mxu0 0
      %371 = vmatpush.bf16.msra.mxu0 0
      %372 = vmatpush.bf16.msra.mxu0 0
      %373 = vmatpush.bf16.msra.mxu0 0
      %374 = vmatpush.bf16.msra.mxu0 0
      %375 = vmatpush.bf16.msra.mxu0 %v341
      %376 = vmatpush.bf16.msra.mxu0 %v340
      %377 = vmatmul.bf16.gmra.mxu0 %v346
      %v378 = vpop.f32.mrf.mxu0
      %v379 = vadd.f32 %v330, %v378
      %v380 = vpop.f32.mrf.mxu0
      %v381 = vadd.f32 %v330, %v380
      %382 = vmatmul.bf16.gmra.mxu0 %v349
      %v383 = vpop.f32.mrf.mxu0
      %v384 = vadd.f32 %v330, %v383
      %v385 = vpop.f32.mrf.mxu0
      %v386 = vadd.f32 %v330, %v385
      %387 = vmatmul.bf16.gmra.mxu0 %v352
      %v388 = vpop.f32.mrf.mxu0
      %v389 = vadd.f32 %v330, %v388
      %v390 = vpop.f32.mrf.mxu0
      %v391 = vadd.f32 %v330, %v390
      %392 = vmatmul.bf16.gmra.mxu0 %v355
      %v393 = vpop.f32.mrf.mxu0
      %v394 = vadd.f32 %v330, %v393
      %v395 = vpop.f32.mrf.mxu0
      %v396 = vadd.f32 %v330, %v395
      %397 = vmatmul.bf16.gmra.mxu0 %v358
      %v398 = vpop.f32.mrf.mxu0
      %v399 = vadd.f32 %v330, %v398
      %v400 = vpop.f32.mrf.mxu0
      %v401 = vadd.f32 %v330, %v400
      %402 = vmatmul.bf16.gmra.mxu0 %v361
      %v403 = vpop.f32.mrf.mxu0
      %v404 = vadd.f32 %v330, %v403
      %v405 = vpop.f32.mrf.mxu0
      %v406 = vadd.f32 %v330, %v405
      %407 = vmatmul.bf16.gmra.mxu0 %v364
      %v408 = vpop.f32.mrf.mxu0
      %v409 = vadd.f32 %v330, %v408
      %v410 = vpop.f32.mrf.mxu0
      %v411 = vadd.f32 %v330, %v410
      %412 = vmatmul.bf16.gmra.mxu0 %v367
      %v413 = vpop.f32.mrf.mxu0
      %v414 = vadd.f32 %v330, %v413
      %v415 = vpop.f32.mrf.mxu0
      %v416 = vadd.f32 %v330, %v415
      %417 = vdwg.mxu0
      %v418 = vmax.f32 %v379, 0.0
      %v419 = vmax.f32 %v381, 0.0
      %v420 = vmax.f32 %v384, 0.0
      %v421 = vmax.f32 %v386, 0.0
      %v422 = vmax.f32 %v389, 0.0
      %v423 = vmax.f32 %v391, 0.0
      %v424 = vmax.f32 %v394, 0.0
      %v425 = vmax.f32 %v396, 0.0
      %v426 = vmax.f32 %v399, 0.0
      %v427 = vmax.f32 %v401, 0.0
      %v428 = vmax.f32 %v404, 0.0
      %v429 = vmax.f32 %v406, 0.0
      %v430 = vmax.f32 %v409, 0.0
      %v431 = vmax.f32 %v411, 0.0
      %v432 = vmax.f32 %v414, 0.0
      %v433 = vmax.f32 %v416, 0.0
      %v434 = vld [vmem:[%s3] sm:$0xf]
      %v435 = vld [vmem:[%s3 + $0x4] sm:$0xf]
      %v436 = vld [vmem:[%s3 + $0x8] sm:$0xf]
      %v437 = vld [vmem:[%s3 + $0xc] sm:$0xf]
      %v438 = vld [vmem:[%s3 + $0x10] sm:$0xf]
      %v439 = vld [vmem:[%s3 + $0x14] sm:$0xf]
      %v440 = vld [vmem:[%s3 + $0x18] sm:$0xf]
      %v441 = vld [vmem:[%s3 + $0x1c] sm:$0xf]
      %v442 = vld [vmem:[%s3 + $0x20] sm:$0xf]
      %v443 = vld [vmem:[%s3 + $0x24] sm:$0xf]
      %v444 = vld [vmem:[%s3 + $0x28] sm:$0xf]
      %v445 = vld [vmem:[%s3 + $0x2c] sm:$0xf]
      %v446 = vld [vmem:[%s3 + $0x30] sm:$0xf]
      %v447 = vld [vmem:[%s3 + $0x34] sm:$0xf]
      %v448 = vld [vmem:[%s3 + $0x38] sm:$0xf]
      %v449 = vld [vmem:[%s3 + $0x3c] sm:$0xf]
      %v450 = vld [vmem:[%s4] sm:$0x1]
      %v451 = vpack.c.bf16 %v419, %v418
      %v452 = vpack.c.bf16 %v421, %v420
      %v453 = vpack.c.bf16 %v423, %v422
      %v454 = vpack.c.bf16 %v425, %v424
      %v455 = vpack.c.bf16 %v427, %v426
      %v456 = vpack.c.bf16 %v429, %v428
      %v457 = vpack.c.bf16 %v431, %v430
      %v458 = vpack.c.bf16 %v433, %v432
      %v460 = vperm.slane %v450, 0
      %v478 = vunpack.c.l.b16 %v434
      %v479 = vunpack.c.l.b16 %v435
      %v480 = vunpack.c.l.b16 %v436
      %v481 = vunpack.c.l.b16 %v437
      %v482 = vunpack.c.l.b16 %v438
      %v483 = vunpack.c.l.b16 %v439
      %v484 = vunpack.c.l.b16 %v440
      %v485 = vunpack.c.l.b16 %v441
      %v486 = vunpack.c.l.b16 %v442
      %v487 = vunpack.c.l.b16 %v443
      %v488 = vunpack.c.l.b16 %v444
      %v489 = vunpack.c.l.b16 %v445
      %v490 = vunpack.c.l.b16 %v446
      %v491 = vunpack.c.l.b16 %v447
      %v492 = vunpack.c.l.b16 %v448
      %v493 = vunpack.c.l.b16 %v449
      %v494 = vpack.c.b16 %v479, %v478
      %v495 = vpack.c.b16 %v481, %v480
      %v496 = vpack.c.b16 %v483, %v482
      %v497 = vpack.c.b16 %v485, %v484
      %v498 = vpack.c.b16 %v487, %v486
      %v499 = vpack.c.b16 %v489, %v488
      %v500 = vpack.c.b16 %v491, %v490
      %v501 = vpack.c.b16 %v493, %v492
      %510 = vmatpush.bf16.msra.mxu0 %v501
      %511 = vmatpush.bf16.msra.mxu0 %v500
      %512 = vmatpush.bf16.msra.mxu0 %v499
      %513 = vmatpush.bf16.msra.mxu0 %v498
      %514 = vmatpush.bf16.msra.mxu0 %v497
      %515 = vmatpush.bf16.msra.mxu0 %v496
      %516 = vmatpush.bf16.msra.mxu0 %v495
      %517 = vmatpush.bf16.msra.mxu0 %v494
      %518 = vmatmul.bf16.gmra.mxu0 %v451
      %v519 = vpop.f32.mrf.mxu0
      %v520 = vadd.f32 %v460, %v519
      %v521 = vpop.f32.mrf.mxu0
      %v522 = vadd.f32 %v460, %v521
      %523 = vmatmul.bf16.gmra.mxu0 %v452
      %v524 = vpop.f32.mrf.mxu0
      %v525 = vadd.f32 %v460, %v524
      %v526 = vpop.f32.mrf.mxu0
      %v527 = vadd.f32 %v460, %v526
      %528 = vmatmul.bf16.gmra.mxu0 %v453
      %v529 = vpop.f32.mrf.mxu0
      %v530 = vadd.f32 %v460, %v529
      %v531 = vpop.f32.mrf.mxu0
      %v532 = vadd.f32 %v460, %v531
      %533 = vmatmul.bf16.gmra.mxu0 %v454
      %v534 = vpop.f32.mrf.mxu0
      %v535 = vadd.f32 %v460, %v534
      %v536 = vpop.f32.mrf.mxu0
      %v537 = vadd.f32 %v460, %v536
      %538 = vmatmul.bf16.gmra.mxu0 %v455
      %v539 = vpop.f32.mrf.mxu0
      %v540 = vadd.f32 %v460, %v539
      %v541 = vpop.f32.mrf.mxu0
      %v542 = vadd.f32 %v460, %v541
      %543 = vmatmul.bf16.gmra.mxu0 %v456
      %v544 = vpop.f32.mrf.mxu0
      %v545 = vadd.f32 %v460, %v544
      %v546 = vpop.f32.mrf.mxu0
      %v547 = vadd.f32 %v460, %v546
      %548 = vmatmul.bf16.gmra.mxu0 %v457
      %v549 = vpop.f32.mrf.mxu0
      %v550 = vadd.f32 %v460, %v549
      %v551 = vpop.f32.mrf.mxu0
      %v552 = vadd.f32 %v460, %v551
      %553 = vmatmul.bf16.gmra.mxu0 %v458
      %v554 = vpop.f32.mrf.mxu0
      %v555 = vadd.f32 %v460, %v554
      %v556 = vpop.f32.mrf.mxu0
      %v557 = vadd.f32 %v460, %v556
      %558 = vdwg.mxu0
      %v559 = vmax.f32 %v520, 0.0
      %v560 = vmax.f32 %v522, 0.0
      %v561 = vmax.f32 %v525, 0.0
      %v562 = vmax.f32 %v527, 0.0
      %v563 = vmax.f32 %v530, 0.0
      %v564 = vmax.f32 %v532, 0.0
      %v565 = vmax.f32 %v535, 0.0
      %v566 = vmax.f32 %v537, 0.0
      %v567 = vmax.f32 %v540, 0.0
      %v568 = vmax.f32 %v542, 0.0
      %v569 = vmax.f32 %v545, 0.0
      %v570 = vmax.f32 %v547, 0.0
      %v571 = vmax.f32 %v550, 0.0
      %v572 = vmax.f32 %v552, 0.0
      %v573 = vmax.f32 %v555, 0.0
      %v574 = vmax.f32 %v557, 0.0
      %v575 = vld [vmem:[%s5] sm:$0x1]
      %v576 = vld [vmem:[#allocation2] sm:$0x1]
      %v577 = vpack.c.bf16 %v560, %v559
      %v578 = vpack.c.bf16 %v562, %v561
      %v579 = vpack.c.bf16 %v564, %v563
      %v580 = vpack.c.bf16 %v566, %v565
      %v581 = vpack.c.bf16 %v568, %v567
      %v582 = vpack.c.bf16 %v570, %v569
      %v583 = vpack.c.bf16 %v572, %v571
      %v584 = vpack.c.bf16 %v574, %v573
      %586 = vset.pattern.permute.xlu0 0
      %587 = vperm.xlu0 %586, %v576
      %v588 = vpop.permute.xlu0 %587
      %v590 = vperm.slane %v588, 0
      %591 = vmatpush.bf16.xpose.msra.mxu0 %v584
      %592 = vmatpush.bf16.xpose.msra.mxu0 %v583
      %593 = vmatpush.bf16.xpose.msra.mxu0 %v582
      %594 = vmatpush.bf16.xpose.msra.mxu0 %v581
      %595 = vmatpush.bf16.xpose.msra.mxu0 %v580
      %596 = vmatpush.bf16.xpose.msra.mxu0 %v579
      %597 = vmatpush.bf16.xpose.msra.mxu0 %v578
      %598 = vmatpush.bf16.xpose.msra.mxu0 %v577
      %599 = vmatmul.bf16.gmra.mxu0 %v575
      %v600 = vpop.f32.mrf.mxu0
      %v601 = vadd.f32 %v590, %v600
      %v602 = vpop.f32.mrf.mxu0
      %603 = vdwg.mxu0
      %604 = vst [vmem:[%s298] sm:$0x1] %v601
      %p605 = scmp.lt.s32.totalorder %s20, 1
      %s606 = scalar_select %p605, %s20, 1
      %s607 = scalar_lea.vmem %s7, %s606
      // Predicated region
      $region49: #{simple_mlp_forward.1} parent=47 // pred_check
        %p608 = pneg %p190
      $region50: #{simple_mlp_forward.1} parent=47 // pred_check_branch
        %610 = sbr.rel (%p608) target = $region52
      $region51: #{simple_mlp_forward.1} parent=47 // pred_region
        _
      $region52: #{simple_mlp_forward.1} parent=47 // pred_fallthru
        _
    $region48: #{simple_mlp_forward.1} parent=5 // pred_fallthru
      _
    %p611 = scmp.le.s32.totalorder 2, %s15
    // Predicated region
    $region53: #{simple_mlp_forward.1} parent=5 // pred_check
      %p612 = pneg %p611
    $region54: #{simple_mlp_forward.1} parent=5 // pred_check_branch
      %614 = sbr.rel (%p612) target = $region56
    $region55: #{simple_mlp_forward.1} parent=5 // pred_region
      %s615 = ssub.s32 %s15, 2
      // Predicated region
      $region57: #{simple_mlp_forward.1} parent=55 // pred_check
        %p616 = pneg %p196
      $region58: #{simple_mlp_forward.1} parent=55 // pred_check_branch
        %618 = sbr.rel (%p616) target = $region60
      $region59: #{simple_mlp_forward.1} parent=55 // pred_region
        %p619 = scmp.lt.s32.totalorder %s21, 1
        %s620 = scalar_select %p619, %s21, 1
        %s621 = scalar_lea.vmem %s7, %s620
      $region60: #{simple_mlp_forward.1} parent=55 // pred_fallthru
        _
    $region56: #{simple_mlp_forward.1} parent=5 // pred_fallthru
      _
  $region6: #{simple_mlp_forward.1} parent=0 // loop_footer
    %s19 = sadd.s32 1, %s15
  $region7: #{simple_mlp_forward.1} parent=0 // loop_footer_branch
    %14 = sbr.rel target = $region3
  $region8: #{simple_mlp_forward.1} parent=0 // loop_exit
    _

</llo_original>
